<compile_context>
chip_gen: v6e
topology: v6e:2x2x1
jax: 0.10.0
libtpu: 0.0.40
codegen_flags: <defaults>
</compile_context>

<pallas_src>
import functools

import jax
import jax.numpy as jnp
from jax.experimental import pallas as pl
from jax.experimental.pallas import tpu as pltpu


NEG_SLOPE = 0.01  # PyTorch LeakyReLU default negative_slope


def mlp_kernel(xT_ref, wb1_ref, wb23_ref, oT_ref):
    # xT_ref  : (13, tile_b)   features on sublanes, batch on lanes (lane-dense)
    # wb1_ref : (24, 14)  = [ w1^T | b1 ]             (w1^T: 24x13, b1: 24x1)
    # wb23_ref: (2, 25)   = [ (w2@w3)^T | (b2@w3+b3)^T ]
    # oT_ref  : (2, tile_b)
    xT = xT_ref[...]

    wb1 = wb1_ref[...]
    w1t = wb1[:, :13]                     # (24, 13)
    b1 = wb1[:, 13:14]                    # (24, 1)  broadcasts over the lane axis

    # Linear(13, 24) + LeakyReLU
    h = jnp.dot(w1t, xT, preferred_element_type=jnp.float32) + b1     # (24, tile_b)
    h = jnp.where(h >= 0, h, NEG_SLOPE * h)
    # Dropout(0.3): identity in eval mode.
    # TODO(synk): training-mode dropout would mask h with pltpu.prng_random_bits here.

    wb23 = wb23_ref[...]
    w23t = wb23[:, :24]                   # (2, 24)
    b23 = wb23[:, 24:25]                  # (2, 1)

    # Fused Linear(24,24) -> Linear(24,2):  (h@w2 + b2)@w3 + b3 == h@(w2@w3) + (b2@w3 + b3)
    o = jnp.dot(w23t, h, preferred_element_type=jnp.float32) + b23    # (2, tile_b)
    oT_ref[...] = o.astype(oT_ref.dtype)


def _mlp_dense(x, params):
    """Plain fused-jnp path for tiny batches (kernel launch overhead not worth it)."""
    w1, b1, w2, b2, w3, b3 = params
    h = x.astype(jnp.float32) @ w1 + b1
    h = jnp.where(h >= 0, h, NEG_SLOPE * h)
    return h @ w2 @ w3 + (b2 @ w3 + b3)


@functools.partial(jax.jit,
                   static_argnames=("tile_b", "min_pallas_batch", "force_pallas"))
def mlp_forward(x, params, *, tile_b=32768, min_pallas_batch=1024, force_pallas=False):
    """Eval-mode forward pass. x: (B, 13) float32. Returns (B, 2) float32."""
    x = x.reshape(x.shape[0], -1)     # parity with x.view(x.size(0), -1)
    B = x.shape[0]

    # Small-batch bypass: pallas_call + pad + transposes are pure overhead for tiny B.
    if B < min_pallas_batch and not force_pallas:
        return _mlp_dense(x, params)

    w1, b1, w2, b2, w3, b3 = params

    # --- Algebraic fusion of the two trailing linears (valid: no nonlinearity between). ---
    w23 = w2 @ w3                                                       # (24, 2)
    b23 = b2 @ w3 + b3                                                  # (1, 2)

    # --- Pack weights + biases into two small resident VMEM buffers. ---
    wb1 = jnp.concatenate([w1.T, b1.reshape(1, -1).T], axis=1).astype(jnp.float32)   # (24, 14)
    wb23 = jnp.concatenate([w23.T, b23.reshape(1, -1).T], axis=1).astype(jnp.float32)  # (2, 25)

    # --- Batch tiling: lane-dense (batch on the 128-wide lane axis). ---
    lanes = pl.cdiv(B, 128) * 128                 # 128-padded batch width
    tile_b = max(128, min(tile_b, lanes))         # don't over-tile small batches
    ntiles = pl.cdiv(lanes, tile_b)
    if ntiles == 1 and lanes >= 256:
        # Keep >= 2 grid steps so the "parallel" axis can shard across TCs (v7x megacore).
        tile_b = pl.cdiv(lanes, 2 * 128) * 128
        ntiles = pl.cdiv(lanes, tile_b)
    b_padded = ntiles * tile_b

    # Transpose+pad+cast of x fuses into one XLA copy pass under the surrounding jit.
    xT = x.astype(jnp.float32).T                                        # (13, B)
    if b_padded != B:
        xT = jnp.pad(xT, ((0, 0), (0, b_padded - B)))                   # zero tail tile

    # VMEM estimate (double-buffered x + out tiles, sublane-padded) -> only raise the
    # scoped-VMEM limit if a user asks for huge tiles; defaults never trigger this.
    vmem_est = 2 * (16 * tile_b * 4) + 2 * (8 * tile_b * 4) + (64 << 10)
    cp_kwargs = dict(dimension_semantics=("parallel",))
    if vmem_est > (14 << 20):
        cp_kwargs["vmem_limit_bytes"] = min(int(vmem_est * 5 // 4), 100 << 20)

    cost = pl.CostEstimate(
        flops=2 * b_padded * (13 * 24 + 24 * 2),
        transcendentals=0,
        bytes_accessed=b_padded * (13 + 2) * 4 + (wb1.size + wb23.size) * 4,
    )

    oT = pl.pallas_call(
        mlp_kernel,
        out_shape=jax.ShapeDtypeStruct((2, b_padded), jnp.float32),
        grid_spec=pltpu.PrefetchScalarGridSpec(
            num_scalar_prefetch=0,
            grid=(ntiles,),
            in_specs=[
                pl.BlockSpec((13, tile_b), lambda i: (0, i)),   # x: pipelined over batch
                pl.BlockSpec((24, 14), lambda i: (0, 0)),       # weights: VMEM-resident
                pl.BlockSpec((2, 25), lambda i: (0, 0)),
            ],
            out_specs=pl.BlockSpec((2, tile_b), lambda i: (0, i)),
        ),
        compiler_params=pltpu.CompilerParams(**cp_kwargs),
        cost_estimate=cost,
    )(xT, wb1, wb23)

    return oT[:, :B].T                                                   # (B, 2)


def init_params(key):
    """Deterministic parameter init (uniform, like PyTorch's default Linear init)."""
    def linear(key, fan_in, fan_out):
        k_w, k_b = jax.random.split(key)
        bound = 1.0 / jnp.sqrt(fan_in)
        # stored as (in, out) so the math is x @ W + b
        w = jax.random.uniform(k_w, (fan_in, fan_out), jnp.float32, -bound, bound)
        b = jax.random.uniform(k_b, (1, fan_out), jnp.float32, -bound, bound)
        return w, b

    k1, k2, k3 = jax.random.split(key, 3)
    w1, b1 = linear(k1, 13, 24)
    w2, b2 = linear(k2, 24, 24)
    w3, b3 = linear(k3, 24, 2)
    return (w1, b1, w2, b2, w3, b3)


def mlp_reference(x, params):
    """Pure-JAX reference of the forward pass (eval mode), unfused."""
    w1, b1, w2, b2, w3, b3 = params
    h = x.reshape(x.shape[0], -1)
    h = h @ w1 + b1
    h = jnp.where(h >= 0, h, NEG_SLOPE * h)
    h = h @ w2 + b2
    h = h @ w3 + b3
    return h


if __name__ == "__main__":
    key = jax.random.PRNGKey(0)
    k_x, k_p = jax.random.split(key)
    params = init_params(k_p)

    # Small batch: force the Pallas path so the kernel itself is exercised.
    B = 8
    x = jax.random.normal(k_x, (B, 13), jnp.float32)
    out = jax.block_until_ready(mlp_forward(x, params, force_pallas=True))
    ref = mlp_reference(x, params)
    assert out.shape == (B, 2), out.shape
    # w2@w3 fusion changes rounding by one accumulation stage -> slightly looser tol.
    assert jnp.allclose(out, ref, atol=2e-5, rtol=1e-4), "mismatch vs reference (B=8)"

    # Larger batch: exercises padding + the >=2-grid-step tiling path.
    B2 = 1000
    x2 = jax.random.normal(k_x, (B2, 13), jnp.float32)
    out2 = jax.block_until_ready(mlp_forward(x2, params, force_pallas=True))
    ref2 = mlp_reference(x2, params)
    assert out2.shape == (B2, 2), out2.shape
    assert jnp.allclose(out2, ref2, atol=2e-5, rtol=1e-4), "mismatch vs reference (B=1000)"

    print("KERNEL_OK")
</pallas_src>

<mosaic_0001>
module attributes {stable_mosaic.version = 11 : i64} {
  func.func @mlp_kernel(%arg0: i32, %arg1: memref<13x128xf32, #tpu.memory_space<vmem>>, %arg2: memref<24x14xf32, #tpu.memory_space<vmem>>, %arg3: memref<2x25xf32, #tpu.memory_space<vmem>>, %arg4: memref<2x128xf32, #tpu.memory_space<vmem>>) attributes {dimension_semantics = [#tpu.dimension_semantics<parallel>], iteration_bounds = array<i64: 1>, scalar_prefetch = 0 : i64, scratch_operands = 0 : i64, tpu.core_type = #tpu.core_type<tc>, window_params = [{transform_indices = @transform_0, window_bounds = array<i64: 13, 128>}, {pipeline_mode = #tpu.pipeline_mode<synchronous>, transform_indices = @transform_1, window_bounds = array<i64: 24, 14>}, {pipeline_mode = #tpu.pipeline_mode<synchronous>, transform_indices = @transform_2, window_bounds = array<i64: 2, 25>}, {transform_indices = @transform_3, window_bounds = array<i64: 2, 128>}]} {
    %c0 = arith.constant 0 : index
    %c0_0 = arith.constant 0 : index
    %0 = vector.load %arg1[%c0, %c0_0] : memref<13x128xf32, #tpu.memory_space<vmem>>, vector<13x128xf32>
    %c0_1 = arith.constant 0 : index
    %c0_2 = arith.constant 0 : index
    %1 = vector.load %arg2[%c0_1, %c0_2] : memref<24x14xf32, #tpu.memory_space<vmem>>, vector<24x14xf32>
    %2 = vector.extract_strided_slice %1 {offsets = [0, 0], sizes = [24, 13], strides = [1, 1]} : vector<24x14xf32> to vector<24x13xf32>
    %3 = vector.extract_strided_slice %1 {offsets = [0, 13], sizes = [24, 1], strides = [1, 1]} : vector<24x14xf32> to vector<24x1xf32>
    %cst = arith.constant dense<0.000000e+00> : vector<24x128xf32>
    %4 = tpu.matmul %2, %0, %cst {dimension_numbers = #tpu.dot_dimension_numbers<[1], [0], [0], [1], [0, 0, 1, 1], [], []>} : vector<24x13xf32>, vector<13x128xf32>, vector<24x128xf32> -> vector<24x128xf32>
    %5 = vector.broadcast %3 : vector<24x1xf32> to vector<24x128xf32>
    %6 = arith.addf %4, %5 : vector<24x128xf32>
    %cst_3 = arith.constant 0.000000e+00 : f32
    %7 = vector.broadcast %cst_3 : f32 to vector<24x128xf32>
    %8 = arith.cmpf oge, %6, %7 : vector<24x128xf32>
    %cst_4 = arith.constant 0.00999999977 : f32
    %9 = vector.broadcast %cst_4 : f32 to vector<24x128xf32>
    %10 = arith.mulf %9, %6 : vector<24x128xf32>
    %11 = arith.select %8, %6, %10 : vector<24x128xi1>, vector<24x128xf32>
    %c0_5 = arith.constant 0 : index
    %c0_6 = arith.constant 0 : index
    %12 = vector.load %arg3[%c0_5, %c0_6] : memref<2x25xf32, #tpu.memory_space<vmem>>, vector<2x25xf32>
    %13 = vector.extract_strided_slice %12 {offsets = [0, 0], sizes = [2, 24], strides = [1, 1]} : vector<2x25xf32> to vector<2x24xf32>
    %14 = vector.extract_strided_slice %12 {offsets = [0, 24], sizes = [2, 1], strides = [1, 1]} : vector<2x25xf32> to vector<2x1xf32>
    %cst_7 = arith.constant dense<0.000000e+00> : vector<2x128xf32>
    %15 = tpu.matmul %13, %11, %cst_7 {dimension_numbers = #tpu.dot_dimension_numbers<[1], [0], [0], [1], [0, 0, 1, 1], [], []>} : vector<2x24xf32>, vector<24x128xf32>, vector<2x128xf32> -> vector<2x128xf32>
    %16 = vector.broadcast %14 : vector<2x1xf32> to vector<2x128xf32>
    %17 = arith.addf %15, %16 : vector<2x128xf32>
    %c0_8 = arith.constant 0 : index
    %c0_9 = arith.constant 0 : index
    %18 = vector.load %arg4[%c0_8, %c0_9] : memref<2x128xf32, #tpu.memory_space<vmem>>, vector<2x128xf32>
    tpu.vector_store %arg4[%c0_8, %c0_9], %17 {strides = array<i32>} : memref<2x128xf32, #tpu.memory_space<vmem>>, vector<2x128xf32>,
    return
  }
  func.func @transform_0(%arg0: i32) -> (i32, i32) {
    %c0_i32 = arith.constant 0 : i32
    %c0_i32_0 = arith.constant 0 : i32
    return %c0_i32, %arg0 : i32, i32
  }
  func.func @transform_1(%arg0: i32) -> (i32, i32) {
    %c0_i32 = arith.constant 0 : i32
    %c0_i32_0 = arith.constant 0 : i32
    %c0_i32_1 = arith.constant 0 : i32
    return %c0_i32, %c0_i32_0 : i32, i32
  }
  func.func @transform_2(%arg0: i32) -> (i32, i32) {
    %c0_i32 = arith.constant 0 : i32
    %c0_i32_0 = arith.constant 0 : i32
    %c0_i32_1 = arith.constant 0 : i32
    return %c0_i32, %c0_i32_0 : i32, i32
  }
  func.func @transform_3(%arg0: i32) -> (i32, i32) {
    %c0_i32 = arith.constant 0 : i32
    %c0_i32_0 = arith.constant 0 : i32
    return %c0_i32, %arg0 : i32, i32
  }
}

</mosaic_0001>

<llo_original>
// kernel: mlp_forward.1
$region0: #{mlp_forward.1}
  #allocation0 [shape = 'u32[]', space=smem, size = 0x4, offset = 0x4, fixed_abs, tag = 'smem constant byte address 0x4 - core index']
  #allocation1 [shape = 'u32[144,128]{1,0:T(1,128)}', space=vmem, size = 0x12000, scoped, tag = 'internal scratch']
  %s0 = inlined_call_operand.vmem [shape: f32[13,128], index: 0, kind: input, shape index: {}]
  %s1 = inlined_call_operand.vmem [shape: f32[24,14], index: 1, kind: input, shape index: {}]
  %s2 = inlined_call_operand.vmem [shape: f32[2,25], index: 2, kind: input, shape index: {}]
  %s3 = inlined_call_operand.vmem [shape: f32[2,128], index: 3, kind: output, shape index: {}]
  %s4 = sld [smem:[#allocation0]]
  $region22: #{mlp_forward.1} parent=0
    _
  %s6 = ssub.s32 1, %s4
  %s7 = scalar_select 0, %s6, %s4
  // Predicated region
  $region2: #{mlp_forward.1} parent=0 // pred_check
    _
  $region3: #{mlp_forward.1} parent=0 // pred_check_branch
    %9 = sbr.rel (0) target = $region5
  $region4: #{mlp_forward.1} parent=0 // pred_region
    _
  $region5: #{mlp_forward.1} parent=0 // pred_fallthru
    _
  // Predicated region
  $region6: #{mlp_forward.1} parent=0 // pred_check
    _
  $region7: #{mlp_forward.1} parent=0 // pred_check_branch
    %11 = sbr.rel (0) target = $region9
  $region8: #{mlp_forward.1} parent=0 // pred_region
    _
  $region9: #{mlp_forward.1} parent=0 // pred_fallthru
    _
  // Predicated region
  $region10: #{mlp_forward.1} parent=0 // pred_check
    _
  $region11: #{mlp_forward.1} parent=0 // pred_check_branch
    %13 = sbr.rel (0) target = $region13
  $region12: #{mlp_forward.1} parent=0 // pred_region
    _
  $region13: #{mlp_forward.1} parent=0 // pred_fallthru
    _
  %v14 = vld [vmem:[%s0] sm:$0xff]
  %v15 = vld [vmem:[%s0 + $0x8] sm:$0x1f]
  %v16 = vld [vmem:[%s1] sm:$0xff]
  %v17 = vld [vmem:[%s1 + $0x8] sm:$0xff]
  %v18 = vld [vmem:[%s1 + $0x10] sm:$0xff]
  %20 = vset.pattern.permute.xlu0 13
  %21 = vperm.xlu0 %20, %v16
  %v22 = vpop.permute.xlu0 %21
  %25 = vset.pattern.permute.xlu0 13
  %26 = vperm.xlu0 %25, %v17
  %v27 = vpop.permute.xlu0 %26
  %30 = vset.pattern.permute.xlu0 13
  %31 = vperm.xlu0 %30, %v18
  %v32 = vpop.permute.xlu0 %31
  %vm34 = vcmask 105472
  %v35 = vsel %vm34, %v16, 0
  %v37 = vsel %vm34, %v17, 0
  %v39 = vsel %vm34, %v18, 0
  %vm41 = vcmask 1044480
  %v43 = vsel %vm41, %v15, 0
  %45 = vmatprep.subr.mxu0 0.0
  %46 = vmatpush1.msra.mxu0 0.0
  %47 = vmatprep.subr.mxu0 0.0
  %48 = vmatpush1.msra.mxu0 0.0
  %49 = vmatprep.subr.mxu0 0.0
  %50 = vmatpush1.msra.mxu0 0.0
  %51 = vmatprep.subr.mxu0 0.0
  %52 = vmatpush1.msra.mxu0 0.0
  %53 = vmatprep.subr.mxu0 0.0
  %54 = vmatpush1.msra.mxu0 0.0
  %55 = vmatprep.subr.mxu0 0.0
  %56 = vmatpush1.msra.mxu0 0.0
  %57 = vmatprep.subr.mxu0 0.0
  %58 = vmatpush1.msra.mxu0 0.0
  %59 = vmatprep.subr.mxu0 0.0
  %60 = vmatpush1.msra.mxu0 0.0
  %61 = vmatprep.subr.mxu0 0.0
  %62 = vmatpush1.msra.mxu0 0.0
  %63 = vmatprep.subr.mxu0 0.0
  %64 = vmatpush1.msra.mxu0 0.0
  %65 = vmatprep.subr.mxu0 0.0
  %66 = vmatpush1.msra.mxu0 0.0
  %67 = vmatprep.subr.mxu0 0.0
  %68 = vmatpush1.msra.mxu0 0.0
  %69 = vmatprep.subr.mxu0 0.0
  %70 = vmatpush1.msra.mxu0 0.0
  %71 = vmatprep.subr.mxu0 0.0
  %72 = vmatpush1.msra.mxu0 0.0
  %73 = vmatprep.subr.mxu0 0.0
  %74 = vmatpush1.msra.mxu0 %v43
  %75 = vmatprep.subr.mxu0 0.0
  %76 = vmatpush1.msra.mxu0 %v14
  %77 = vmatprep.subr.mxu0 0.0
  %78 = vmatpush2.msra.mxu0 0.0
  %79 = vmatprep.subr.mxu0 0.0
  %80 = vmatpush2.msra.mxu0 0.0
  %81 = vmatprep.subr.mxu0 0.0
  %82 = vmatpush2.msra.mxu0 0.0
  %83 = vmatprep.subr.mxu0 0.0
  %84 = vmatpush2.msra.mxu0 0.0
  %85 = vmatprep.subr.mxu0 0.0
  %86 = vmatpush2.msra.mxu0 0.0
  %87 = vmatprep.subr.mxu0 0.0
  %88 = vmatpush2.msra.mxu0 0.0
  %89 = vmatprep.subr.mxu0 0.0
  %90 = vmatpush2.msra.mxu0 0.0
  %91 = vmatprep.subr.mxu0 0.0
  %92 = vmatpush2.msra.mxu0 0.0
  %93 = vmatprep.subr.mxu0 0.0
  %94 = vmatpush2.msra.mxu0 0.0
  %95 = vmatprep.subr.mxu0 0.0
  %96 = vmatpush2.msra.mxu0 0.0
  %97 = vmatprep.subr.mxu0 0.0
  %98 = vmatpush2.msra.mxu0 0.0
  %99 = vmatprep.subr.mxu0 0.0
  %100 = vmatpush2.msra.mxu0 0.0
  %101 = vmatprep.subr.mxu0 0.0
  %102 = vmatpush2.msra.mxu0 0.0
  %103 = vmatprep.subr.mxu0 0.0
  %104 = vmatpush2.msra.mxu0 0.0
  %105 = vmatprep.subr.mxu0 0.0
  %106 = vmatpush2.msra.mxu0 0.0
  %107 = vmatprep.subr.mxu0 0.0
  %108 = vmatpush2.msra.mxu0 0.0
  %109 = vmatprep.mubr.f32.mxu0 0.0
  %110 = vmatmul.mubr.f32.gmra.mxu0 %v35
  %v111 = vpop.f32.mrf.mxu0
  %v112 = vadd.f32 %v22, %v111
  %v113 = vpop.f32.mrf.mxu0
  %114 = vmatprep.mubr.f32.mxu0 0.0
  %115 = vmatmul.mubr.f32.gmra.mxu0 %v37
  %v116 = vpop.f32.mrf.mxu0
  %v117 = vadd.f32 %v27, %v116
  %v118 = vpop.f32.mrf.mxu0
  %119 = vmatprep.mubr.f32.mxu0 0.0
  %120 = vmatmul.mubr.f32.gmra.mxu0 %v39
  %v121 = vpop.f32.mrf.mxu0
  %v122 = vadd.f32 %v32, %v121
  %v123 = vpop.f32.mrf.mxu0
  %124 = vdwg.mxu0
  %vm125 = vcmp.ge.f32.partialorder %v112, 0.0
  %vm126 = vcmp.ge.f32.partialorder %v117, 0.0
  %vm127 = vcmp.ge.f32.partialorder %v122, 0.0
  %v128 = vmul.f32 %v112, 0.01
  %v129 = vmul.f32 %v117, 0.01
  %v130 = vmul.f32 %v122, 0.01
  %v131 = vsel %vm125, %v112, %v128
  %v132 = vsel %vm126, %v117, %v129
  %v133 = vsel %vm127, %v122, %v130
  %v134 = vld [vmem:[%s2] sm:$0x3]
  %136 = vset.pattern.permute.xlu0 24
  %137 = vperm.xlu0 %136, %v134
  %v138 = vpop.permute.xlu0 %137
  %vm140 = vcmask 195584
  %v141 = vsel %vm140, %v134, 0
  %143 = vmatprep.subr.mxu0 0.0
  %144 = vmatpush1.msra.mxu0 0.0
  %145 = vmatprep.subr.mxu0 0.0
  %146 = vmatpush1.msra.mxu0 0.0
  %147 = vmatprep.subr.mxu0 0.0
  %148 = vmatpush1.msra.mxu0 0.0
  %149 = vmatprep.subr.mxu0 0.0
  %150 = vmatpush1.msra.mxu0 0.0
  %151 = vmatprep.subr.mxu0 0.0
  %152 = vmatpush1.msra.mxu0 0.0
  %153 = vmatprep.subr.mxu0 0.0
  %154 = vmatpush1.msra.mxu0 0.0
  %155 = vmatprep.subr.mxu0 0.0
  %156 = vmatpush1.msra.mxu0 0.0
  %157 = vmatprep.subr.mxu0 0.0
  %158 = vmatpush1.msra.mxu0 0.0
  %159 = vmatprep.subr.mxu0 0.0
  %160 = vmatpush1.msra.mxu0 0.0
  %161 = vmatprep.subr.mxu0 0.0
  %162 = vmatpush1.msra.mxu0 0.0
  %163 = vmatprep.subr.mxu0 0.0
  %164 = vmatpush1.msra.mxu0 0.0
  %165 = vmatprep.subr.mxu0 0.0
  %166 = vmatpush1.msra.mxu0 0.0
  %167 = vmatprep.subr.mxu0 0.0
  %168 = vmatpush1.msra.mxu0 0.0
  %169 = vmatprep.subr.mxu0 0.0
  %170 = vmatpush1.msra.mxu0 %v133
  %171 = vmatprep.subr.mxu0 0.0
  %172 = vmatpush1.msra.mxu0 %v132
  %173 = vmatprep.subr.mxu0 0.0
  %174 = vmatpush1.msra.mxu0 %v131
  %175 = vmatprep.subr.mxu0 0.0
  %176 = vmatpush2.msra.mxu0 0.0
  %177 = vmatprep.subr.mxu0 0.0
  %178 = vmatpush2.msra.mxu0 0.0
  %179 = vmatprep.subr.mxu0 0.0
  %180 = vmatpush2.msra.mxu0 0.0
  %181 = vmatprep.subr.mxu0 0.0
  %182 = vmatpush2.msra.mxu0 0.0
  %183 = vmatprep.subr.mxu0 0.0
  %184 = vmatpush2.msra.mxu0 0.0
  %185 = vmatprep.subr.mxu0 0.0
  %186 = vmatpush2.msra.mxu0 0.0
  %187 = vmatprep.subr.mxu0 0.0
  %188 = vmatpush2.msra.mxu0 0.0
  %189 = vmatprep.subr.mxu0 0.0
  %190 = vmatpush2.msra.mxu0 0.0
  %191 = vmatprep.subr.mxu0 0.0
  %192 = vmatpush2.msra.mxu0 0.0
  %193 = vmatprep.subr.mxu0 0.0
  %194 = vmatpush2.msra.mxu0 0.0
  %195 = vmatprep.subr.mxu0 0.0
  %196 = vmatpush2.msra.mxu0 0.0
  %197 = vmatprep.subr.mxu0 0.0
  %198 = vmatpush2.msra.mxu0 0.0
  %199 = vmatprep.subr.mxu0 0.0
  %200 = vmatpush2.msra.mxu0 0.0
  %201 = vmatprep.subr.mxu0 0.0
  %202 = vmatpush2.msra.mxu0 0.0
  %203 = vmatprep.subr.mxu0 0.0
  %204 = vmatpush2.msra.mxu0 0.0
  %205 = vmatprep.subr.mxu0 0.0
  %206 = vmatpush2.msra.mxu0 0.0
  %207 = vmatprep.mubr.f32.mxu0 0.0
  %208 = vmatmul.mubr.f32.gmra.mxu0 %v141
  %v209 = vpop.f32.mrf.mxu0
  %v210 = vadd.f32 %v138, %v209
  %v211 = vpop.f32.mrf.mxu0
  %212 = vdwg.mxu0
  %213 = vst [vmem:[%s3] sm:$0x3] %v210
  // Predicated region
  $region14: #{mlp_forward.1} parent=0 // pred_check
    _
  $region15: #{mlp_forward.1} parent=0 // pred_check_branch
    %215 = sbr.rel (0) target = $region17
  $region16: #{mlp_forward.1} parent=0 // pred_region
    _
  $region17: #{mlp_forward.1} parent=0 // pred_fallthru
    _
  // Predicated region
  $region18: #{mlp_forward.1} parent=0 // pred_check
    _
  $region19: #{mlp_forward.1} parent=0 // pred_check_branch
    %217 = sbr.rel (0) target = $region21
  $region20: #{mlp_forward.1} parent=0 // pred_region
    _
  $region21: #{mlp_forward.1} parent=0 // pred_fallthru
    _

</llo_original>
